<compile_context>
chip_gen: v6e
topology: v6e:2x2x1
jax: 0.10.0
libtpu: 0.0.40
codegen_flags: <defaults>
</compile_context>

<pallas_src>
import functools
import jax
import jax.numpy as jnp
from jax.experimental import pallas as pl
from jax.experimental.pallas import tpu as pltpu


# ----------------------------- Pallas kernel --------------------------------
def _channel_attention_kernel(x_ref, w1_ref, b1_ref, w2_ref, b2_ref, o_ref):
    """One grid step == block_b batch elements; everything fits in VMEM."""
    x = x_ref[...]                                            # (Bb, C, HWp), x dtype

    # Squeeze: global sum over the spatial (lane) dim, accumulated in f32.
    # (1/HW is folded into w1 on the host, so this equals the mean path.)
    pooled = jnp.sum(x.astype(jnp.float32), axis=-1)          # (Bb, C) f32

    # Excitation: two 1x1 convs == two dense layers on the pooled vector.
    h = jnp.dot(pooled, w1_ref[...], preferred_element_type=jnp.float32) + b1_ref[0]
    h = jnp.maximum(h, 0.0)                                   # ReLU
    y = jnp.dot(h, w2_ref[...], preferred_element_type=jnp.float32) + b2_ref[0]
    y = jax.nn.sigmoid(y)                                     # (Bb, C), EUP path

    # Scale: per-channel gate broadcast across the spatial (lane) dim.
    o_ref[...] = (x * y.astype(x.dtype)[:, :, None]).astype(o_ref.dtype)


# ------------------------------ sizing helpers --------------------------------
def _vmem_capacity_bytes():
    """Per-core VMEM capacity; conservative (v7x, 64 MiB) fallback."""
    try:
        return int(pltpu.get_tpu_info().vmem_capacity_bytes)
    except Exception:
        return 64 << 20


def _pick_block_b(B, per_b_bytes, block_budget_bytes):
    """Largest batch divisor whose double-buffered x+out blocks (4 buffers)
    fit `block_budget_bytes`.  Only insist on >=2 grid steps (to feed the 2nd
    TensorCore on v7x) when each step's x block would still be >= 2 MiB."""
    max_b = max(1, block_budget_bytes // (4 * per_b_bytes))
    divs = [d for d in range(1, B + 1) if B % d == 0 and d <= max_b]
    block_b = max(divs) if divs else 1
    if block_b == B and B > 1:
        smaller = [d for d in divs if d < B and d * per_b_bytes >= (2 << 20)]
        if smaller:
            block_b = max(smaller)
    return block_b


# ------------------------------ wrapper --------------------------------------
def channel_attention(x, w1, b1, w2, b2, *, block_b=None, donate_x=False):
    """x: (B, C, H, W), f32 or bf16.
    w1: (C, Cmid), b1: (Cmid,), w2: (Cmid, C), b2: (C,).
    w1/w2 are PyTorch conv weights with the 1x1 spatial dims squeezed and
    transposed: w1 = conv1.weight[:, :, 0, 0].T, w2 = conv2.weight[:, :, 0, 0].T
    """
    B, C, H, W = x.shape
    HW = H * W
    HW_pad = ((HW + 127) // 128) * 128          # lane-dense stores for any H, W
    Cm = w1.shape[1]
    itemsize = jnp.dtype(x.dtype).itemsize

    vmem_cap = _vmem_capacity_bytes()
    # Total budget for the double-buffered x + out blocks (4 buffers).
    block_budget = min(vmem_cap // 4, 32 << 20)

    per_b = C * HW_pad * itemsize               # one batch element of x (== out)
    if block_b is None:
        block_b = _pick_block_b(B, per_b, block_budget)
    # TODO(synk): support non-divisor B via pl.cdiv grid + masked tail block.
    assert B % block_b == 0, "block_b must divide the batch size"

    x2 = x.reshape(B, C, HW)
    if HW_pad != HW:
        x2 = jnp.pad(x2, ((0, 0), (0, 0), (0, HW_pad - HW)))

    # Fold the average-pool's 1/HW into conv1's weight (linear, host-side).
    w1s = (w1.astype(jnp.float32) * (1.0 / HW))
    w2f = w2.astype(jnp.float32)
    b1f = b1.astype(jnp.float32).reshape(1, -1)
    b2f = b2.astype(jnp.float32).reshape(1, -1)

    # Explicit, generation-aware VMEM limit (leave headroom; <= 48 MiB so the
    # same choice is legal on v7x's 64 MiB VMEM).
    weight_bytes = 4 * (w1s.size + b1f.size + w2f.size + b2f.size)
    needed = 4 * block_b * per_b + 2 * weight_bytes + (2 << 20)
    vmem_limit = int(min(max(needed, 16 << 20), 48 << 20, vmem_cap * 3 // 4))

    out = pl.pallas_call(
        _channel_attention_kernel,
        out_shape=jax.ShapeDtypeStruct((B, C, HW_pad), x.dtype),
        grid_spec=pltpu.PrefetchScalarGridSpec(
            num_scalar_prefetch=0,
            grid=(B // block_b,),
            in_specs=[
                pl.BlockSpec((block_b, C, HW_pad), lambda i: (i, 0, 0)),  # x slab
                pl.BlockSpec((C, Cm), lambda i: (0, 0)),    # conv1 weight (VMEM-resident)
                pl.BlockSpec((1, Cm), lambda i: (0, 0)),    # conv1 bias   (VMEM-resident)
                pl.BlockSpec((Cm, C), lambda i: (0, 0)),    # conv2 weight (VMEM-resident)
                pl.BlockSpec((1, C), lambda i: (0, 0)),     # conv2 bias   (VMEM-resident)
            ],
            out_specs=pl.BlockSpec((block_b, C, HW_pad), lambda i: (i, 0, 0)),
        ),
        compiler_params=pltpu.CompilerParams(
            dimension_semantics=("parallel",),
            vmem_limit_bytes=vmem_limit,
        ),
        input_output_aliases=({0: 0} if donate_x else {}),
    )(x2, w1s, b1f, w2f, b2f)

    if HW_pad != HW:
        out = out[..., :HW]
    return out.reshape(B, C, H, W)


# ------------------------- pure-JAX reference ---------------------------------
def reference(x, w1, b1, w2, b2):
    pooled = x.astype(jnp.float32).mean(axis=(2, 3))          # (B, C)
    h = jnp.maximum(pooled @ w1 + b1, 0.0)
    y = jax.nn.sigmoid(h @ w2 + b2)                           # (B, C)
    return x * y.astype(x.dtype)[:, :, None, None]


# --------------------------------- main ---------------------------------------
if __name__ == "__main__":
    batch = 2
    num_feat = 64
    squeeze_factor = 16
    H = W = 16
    Cm = num_feat // squeeze_factor

    key = jax.random.PRNGKey(0)
    ks = jax.random.split(key, 5)

    x = jax.random.normal(ks[0], (batch, num_feat, H, W), jnp.float32)
    # Conv2d(num_feat, num_feat//sf, 1) weight (Cm, C, 1, 1) -> stored as (C, Cm)
    w1 = jax.random.normal(ks[1], (num_feat, Cm), jnp.float32) * 0.1
    b1 = jax.random.normal(ks[2], (Cm,), jnp.float32) * 0.02
    # Conv2d(num_feat//sf, num_feat, 1) weight (C, Cm, 1, 1) -> stored as (Cm, C)
    w2 = jax.random.normal(ks[3], (Cm, num_feat), jnp.float32) * 0.1
    b2 = jax.random.normal(ks[4], (num_feat,), jnp.float32) * 0.02

    out = channel_attention(x, w1, b1, w2, b2)
    out = jax.block_until_ready(out)

    ref = reference(x, w1, b1, w2, b2)
    assert out.shape == x.shape
    assert jnp.allclose(out, ref, atol=1e-5, rtol=1e-5), "mismatch vs reference"

    print("KERNEL_OK")
</pallas_src>

<mosaic_0001>
module attributes {stable_mosaic.version = 11 : i64} {
  func.func @_channel_attention_kernel(%arg0: i32, %arg1: memref<2x64x256xf32, #tpu.memory_space<vmem>>, %arg2: memref<64x4xf32, #tpu.memory_space<vmem>>, %arg3: memref<1x4xf32, #tpu.memory_space<vmem>>, %arg4: memref<4x64xf32, #tpu.memory_space<vmem>>, %arg5: memref<1x64xf32, #tpu.memory_space<vmem>>, %arg6: memref<2x64x256xf32, #tpu.memory_space<vmem>>) attributes {dimension_semantics = [#tpu.dimension_semantics<parallel>], iteration_bounds = array<i64: 1>, scalar_prefetch = 0 : i64, scratch_operands = 0 : i64, tpu.core_type = #tpu.core_type<tc>, window_params = [{transform_indices = @transform_0, window_bounds = array<i64: 2, 64, 256>}, {pipeline_mode = #tpu.pipeline_mode<synchronous>, transform_indices = @transform_1, window_bounds = array<i64: 64, 4>}, {pipeline_mode = #tpu.pipeline_mode<synchronous>, transform_indices = @transform_2, window_bounds = array<i64: 1, 4>}, {pipeline_mode = #tpu.pipeline_mode<synchronous>, transform_indices = @transform_3, window_bounds = array<i64: 4, 64>}, {pipeline_mode = #tpu.pipeline_mode<synchronous>, transform_indices = @transform_4, window_bounds = array<i64: 1, 64>}, {transform_indices = @transform_5, window_bounds = array<i64: 2, 64, 256>}]} {
    %c0 = arith.constant 0 : index
    %c0_0 = arith.constant 0 : index
    %c0_1 = arith.constant 0 : index
    %0 = vector.load %arg1[%c0, %c0_0, %c0_1] : memref<2x64x256xf32, #tpu.memory_space<vmem>>, vector<2x64x256xf32>
    %cst = arith.constant dense<0.000000e+00> : vector<2x64xf32>
    %1 = vector.multi_reduction <add>, %0, %cst [2] : vector<2x64x256xf32> to vector<2x64xf32>
    %c0_2 = arith.constant 0 : index
    %c0_3 = arith.constant 0 : index
    %2 = vector.load %arg2[%c0_2, %c0_3] : memref<64x4xf32, #tpu.memory_space<vmem>>, vector<64x4xf32>
    %cst_4 = arith.constant dense<0.000000e+00> : vector<2x4xf32>
    %3 = tpu.matmul %1, %2, %cst_4 {dimension_numbers = #tpu.dot_dimension_numbers<[1], [0], [0], [1], [0, 0, 1, 1], [], []>} : vector<2x64xf32>, vector<64x4xf32>, vector<2x4xf32> -> vector<2x4xf32>
    %c0_5 = arith.constant 0 : index
    %c0_6 = arith.constant 0 : index
    %4 = vector.load %arg3[%c0_5, %c0_6] : memref<1x4xf32, #tpu.memory_space<vmem>>, vector<1x4xf32>
    %5 = vector.shape_cast %4 : vector<1x4xf32> to vector<4xf32>
    %6 = vector.shape_cast %5 : vector<4xf32> to vector<1x4xf32>
    %7 = vector.broadcast %6 : vector<1x4xf32> to vector<2x4xf32>
    %8 = arith.addf %3, %7 : vector<2x4xf32>
    %cst_7 = arith.constant 0.000000e+00 : f32
    %9 = vector.broadcast %cst_7 : f32 to vector<2x4xf32>
    %10 = arith.maximumf %8, %9 : vector<2x4xf32>
    %c0_8 = arith.constant 0 : index
    %c0_9 = arith.constant 0 : index
    %11 = vector.load %arg4[%c0_8, %c0_9] : memref<4x64xf32, #tpu.memory_space<vmem>>, vector<4x64xf32>
    %cst_10 = arith.constant dense<0.000000e+00> : vector<2x64xf32>
    %12 = tpu.matmul %10, %11, %cst_10 {dimension_numbers = #tpu.dot_dimension_numbers<[1], [0], [0], [1], [0, 0, 1, 1], [], []>} : vector<2x4xf32>, vector<4x64xf32>, vector<2x64xf32> -> vector<2x64xf32>
    %c0_11 = arith.constant 0 : index
    %c0_12 = arith.constant 0 : index
    %13 = vector.load %arg5[%c0_11, %c0_12] : memref<1x64xf32, #tpu.memory_space<vmem>>, vector<1x64xf32>
    %14 = vector.shape_cast %13 : vector<1x64xf32> to vector<64xf32>
    %15 = vector.shape_cast %14 : vector<64xf32> to vector<1x64xf32>
    %16 = vector.broadcast %15 : vector<1x64xf32> to vector<2x64xf32>
    %17 = arith.addf %12, %16 : vector<2x64xf32>
    %18 = arith.negf %17 : vector<2x64xf32>
    %19 = math.exp %18 : vector<2x64xf32>
    %cst_13 = arith.constant 1.000000e+00 : f32
    %20 = vector.broadcast %cst_13 : f32 to vector<2x64xf32>
    %21 = arith.addf %20, %19 : vector<2x64xf32>
    %22 = arith.divf %20, %21 : vector<2x64xf32>
    %23 = vector.shape_cast %22 : vector<2x64xf32> to vector<2x64x1xf32>
    %24 = vector.broadcast %23 : vector<2x64x1xf32> to vector<2x64x256xf32>
    %25 = arith.mulf %0, %24 : vector<2x64x256xf32>
    %c0_14 = arith.constant 0 : index
    %c0_15 = arith.constant 0 : index
    %c0_16 = arith.constant 0 : index
    %26 = vector.load %arg6[%c0_14, %c0_15, %c0_16] : memref<2x64x256xf32, #tpu.memory_space<vmem>>, vector<2x64x256xf32>
    tpu.vector_store %arg6[%c0_14, %c0_15, %c0_16], %25 {strides = array<i32>} : memref<2x64x256xf32, #tpu.memory_space<vmem>>, vector<2x64x256xf32>,
    return
  }
  func.func @transform_0(%arg0: i32) -> (i32, i32, i32) {
    %c0_i32 = arith.constant 0 : i32
    %c0_i32_0 = arith.constant 0 : i32
    %c0_i32_1 = arith.constant 0 : i32
    return %arg0, %c0_i32, %c0_i32_0 : i32, i32, i32
  }
  func.func @transform_1(%arg0: i32) -> (i32, i32) {
    %c0_i32 = arith.constant 0 : i32
    %c0_i32_0 = arith.constant 0 : i32
    %c0_i32_1 = arith.constant 0 : i32
    return %c0_i32, %c0_i32_0 : i32, i32
  }
  func.func @transform_2(%arg0: i32) -> (i32, i32) {
    %c0_i32 = arith.constant 0 : i32
    %c0_i32_0 = arith.constant 0 : i32
    %c0_i32_1 = arith.constant 0 : i32
    return %c0_i32, %c0_i32_0 : i32, i32
  }
  func.func @transform_3(%arg0: i32) -> (i32, i32) {
    %c0_i32 = arith.constant 0 : i32
    %c0_i32_0 = arith.constant 0 : i32
    %c0_i32_1 = arith.constant 0 : i32
    return %c0_i32, %c0_i32_0 : i32, i32
  }
  func.func @transform_4(%arg0: i32) -> (i32, i32) {
    %c0_i32 = arith.constant 0 : i32
    %c0_i32_0 = arith.constant 0 : i32
    %c0_i32_1 = arith.constant 0 : i32
    return %c0_i32, %c0_i32_0 : i32, i32
  }
  func.func @transform_5(%arg0: i32) -> (i32, i32, i32) {
    %c0_i32 = arith.constant 0 : i32
    %c0_i32_0 = arith.constant 0 : i32
    %c0_i32_1 = arith.constant 0 : i32
    return %arg0, %c0_i32, %c0_i32_0 : i32, i32, i32
  }
}

</mosaic_0001>

<llo_original>
// kernel: tpu_custom_call.1
$region0: #{tpu_custom_call.1}
  #allocation0 [shape = 'u32[]', space=smem, size = 0x4, offset = 0x4, fixed_abs, tag = 'smem constant byte address 0x4 - core index']
  #allocation1 [shape = 'u32[144,128]{1,0:T(1,128)}', space=vmem, size = 0x12000, scoped, tag = 'internal scratch']
  %s0 = inlined_call_operand.hbm [shape: f32[2,64,256], index: 0, kind: input, shape index: {}]
  %s1 = inlined_call_operand.vmem [shape: f32[64,4], index: 1, kind: input, shape index: {}]
  %s2 = inlined_call_operand.vmem [shape: f32[1,4], index: 2, kind: input, shape index: {}]
  %s3 = inlined_call_operand.vmem [shape: f32[4,64], index: 3, kind: input, shape index: {}]
  %s4 = inlined_call_operand.vmem [shape: f32[1,64], index: 4, kind: input, shape index: {}]
  %s5 = inlined_call_operand.hbm [shape: f32[2,64,256], index: 5, kind: output, shape index: {}]
  %s6 = sld [smem:[#allocation0]]
  $region34: #{tpu_custom_call.1} parent=0
    _
  %s8 = ssub.s32 1, %s6
  %s9 = scalar_select 0, %s8, %s6
  $region1: #{tpu_custom_call.1} parent=0
    #allocation2 [shape = 'u8[131072]{0}', space=vmem, size = 0x20000, scoped, tag = 'input window, operand 0, single buffered']
    #allocation3 [shape = 's32[1]{0}', space=sflag, size = 0x4, scoped, tag = 'scoped memory for tpu_custom_call.1']
    #allocation4 [shape = 's32[1]{0}', space=sflag, size = 0x4, scoped, tag = 'scoped memory for tpu_custom_call.1']
    #allocation5 [shape = 'u8[131072]{0}', space=vmem, size = 0x20000, scoped, tag = 'output window, operand 0, single buffered']
    %10 = vsyncpa [#allocation3], 0
    %11 = vsyncpa [#allocation4], 0
    // Predicated region
    $region2: #{tpu_custom_call.1} parent=1 // pred_check
      _
    $region3: #{tpu_custom_call.1} parent=1 // pred_check_branch
      %13 = sbr.rel (0) target = $region5
    $region4: #{tpu_custom_call.1} parent=1 // pred_region
      %s15 = ssub.s32 4096, 4096
      %16 = vsyncadd [#allocation3], %s15
      %s17 = sshll.u32 [#allocation2], 4
      %s18 = int_to_ptr.vmem [resolvable:$true] %s17
      %23 = dma.hbm_to_vmem [thread:$0]  %s0, 4096, %s18, [#allocation3], 256, 256, 16
    $region5: #{tpu_custom_call.1} parent=1 // pred_fallthru
      _
    // Predicated region
    $region6: #{tpu_custom_call.1} parent=1 // pred_check
      _
    $region7: #{tpu_custom_call.1} parent=1 // pred_check_branch
      %25 = sbr.rel (0) target = $region9
    $region8: #{tpu_custom_call.1} parent=1 // pred_region
      _
    $region9: #{tpu_custom_call.1} parent=1 // pred_fallthru
      _
    // Predicated region
    $region10: #{tpu_custom_call.1} parent=1 // pred_check
      _
    $region11: #{tpu_custom_call.1} parent=1 // pred_check_branch
      %27 = sbr.rel (0) target = $region13
    $region12: #{tpu_custom_call.1} parent=1 // pred_region
      _
    $region13: #{tpu_custom_call.1} parent=1 // pred_fallthru
      _
    // Predicated region
    $region14: #{tpu_custom_call.1} parent=1 // pred_check
      _
    $region15: #{tpu_custom_call.1} parent=1 // pred_check_branch
      %29 = sbr.rel (0) target = $region17
    $region16: #{tpu_custom_call.1} parent=1 // pred_region
      _
    $region17: #{tpu_custom_call.1} parent=1 // pred_fallthru
      _
    // Predicated region
    $region18: #{tpu_custom_call.1} parent=1 // pred_check
      _
    $region19: #{tpu_custom_call.1} parent=1 // pred_check_branch
      %31 = sbr.rel (0) target = $region21
    $region20: #{tpu_custom_call.1} parent=1 // pred_region
      _
    $region21: #{tpu_custom_call.1} parent=1 // pred_fallthru
      _
    // Predicated region
    $region22: #{tpu_custom_call.1} parent=1 // pred_check
      _
    $region23: #{tpu_custom_call.1} parent=1 // pred_check_branch
      %33 = sbr.rel (0) target = $region25
    $region24: #{tpu_custom_call.1} parent=1 // pred_region
      %34 = dma.done [#allocation3], 4096
    $region25: #{tpu_custom_call.1} parent=1 // pred_fallthru
      _
    %v35 = vld [vmem:[#allocation2] sm:$0xff]
    %v36 = vld [vmem:[#allocation2 + $0x8] sm:$0xff]
    %v37 = vld [vmem:[#allocation2 + $0x10] sm:$0xff]
    %v38 = vld [vmem:[#allocation2 + $0x18] sm:$0xff]
    %v39 = vld [vmem:[#allocation2 + $0x20] sm:$0xff]
    %v40 = vld [vmem:[#allocation2 + $0x28] sm:$0xff]
    %v41 = vld [vmem:[#allocation2 + $0x30] sm:$0xff]
    %v42 = vld [vmem:[#allocation2 + $0x38] sm:$0xff]
    %v43 = vld [vmem:[#allocation2 + $0x40] sm:$0xff]
    %v44 = vld [vmem:[#allocation2 + $0x48] sm:$0xff]
    %v45 = vld [vmem:[#allocation2 + $0x50] sm:$0xff]
    %v46 = vld [vmem:[#allocation2 + $0x58] sm:$0xff]
    %v47 = vld [vmem:[#allocation2 + $0x60] sm:$0xff]
    %v48 = vld [vmem:[#allocation2 + $0x68] sm:$0xff]
    %v49 = vld [vmem:[#allocation2 + $0x70] sm:$0xff]
    %v50 = vld [vmem:[#allocation2 + $0x78] sm:$0xff]
    %v51 = vld [vmem:[#allocation2 + $0x80] sm:$0xff]
    %v52 = vld [vmem:[#allocation2 + $0x88] sm:$0xff]
    %v53 = vld [vmem:[#allocation2 + $0x90] sm:$0xff]
    %v54 = vld [vmem:[#allocation2 + $0x98] sm:$0xff]
    %v55 = vld [vmem:[#allocation2 + $0xa0] sm:$0xff]
    %v56 = vld [vmem:[#allocation2 + $0xa8] sm:$0xff]
    %v57 = vld [vmem:[#allocation2 + $0xb0] sm:$0xff]
    %v58 = vld [vmem:[#allocation2 + $0xb8] sm:$0xff]
    %v59 = vld [vmem:[#allocation2 + $0xc0] sm:$0xff]
    %v60 = vld [vmem:[#allocation2 + $0xc8] sm:$0xff]
    %v61 = vld [vmem:[#allocation2 + $0xd0] sm:$0xff]
    %v62 = vld [vmem:[#allocation2 + $0xd8] sm:$0xff]
    %v63 = vld [vmem:[#allocation2 + $0xe0] sm:$0xff]
    %v64 = vld [vmem:[#allocation2 + $0xe8] sm:$0xff]
    %v65 = vld [vmem:[#allocation2 + $0xf0] sm:$0xff]
    %v66 = vld [vmem:[#allocation2 + $0xf8] sm:$0xff]
    %v67 = vadd.f32 %v35, %v36
    %68 = vadd.xlane.f32.xlu0 %v67
    %v69 = vpop.xlane.xlu0 %68
    %v70 = vadd.f32 %v37, %v38
    %71 = vadd.xlane.f32.xlu0 %v70
    %v72 = vpop.xlane.xlu0 %71
    %v73 = vadd.f32 %v39, %v40
    %74 = vadd.xlane.f32.xlu0 %v73
    %v75 = vpop.xlane.xlu0 %74
    %v76 = vadd.f32 %v41, %v42
    %77 = vadd.xlane.f32.xlu0 %v76
    %v78 = vpop.xlane.xlu0 %77
    %v79 = vadd.f32 %v43, %v44
    %80 = vadd.xlane.f32.xlu0 %v79
    %v81 = vpop.xlane.xlu0 %80
    %v82 = vadd.f32 %v45, %v46
    %83 = vadd.xlane.f32.xlu0 %v82
    %v84 = vpop.xlane.xlu0 %83
    %v85 = vadd.f32 %v47, %v48
    %86 = vadd.xlane.f32.xlu0 %v85
    %v87 = vpop.xlane.xlu0 %86
    %v88 = vadd.f32 %v49, %v50
    %89 = vadd.xlane.f32.xlu0 %v88
    %v90 = vpop.xlane.xlu0 %89
    %v91 = vadd.f32 %v51, %v52
    %92 = vadd.xlane.f32.xlu0 %v91
    %v93 = vpop.xlane.xlu0 %92
    %v94 = vadd.f32 %v53, %v54
    %95 = vadd.xlane.f32.xlu0 %v94
    %v96 = vpop.xlane.xlu0 %95
    %v97 = vadd.f32 %v55, %v56
    %98 = vadd.xlane.f32.xlu0 %v97
    %v99 = vpop.xlane.xlu0 %98
    %v100 = vadd.f32 %v57, %v58
    %101 = vadd.xlane.f32.xlu0 %v100
    %v102 = vpop.xlane.xlu0 %101
    %v103 = vadd.f32 %v59, %v60
    %104 = vadd.xlane.f32.xlu0 %v103
    %v105 = vpop.xlane.xlu0 %104
    %v106 = vadd.f32 %v61, %v62
    %107 = vadd.xlane.f32.xlu0 %v106
    %v108 = vpop.xlane.xlu0 %107
    %v109 = vadd.f32 %v63, %v64
    %110 = vadd.xlane.f32.xlu0 %v109
    %v111 = vpop.xlane.xlu0 %110
    %v112 = vadd.f32 %v65, %v66
    %113 = vadd.xlane.f32.xlu0 %v112
    %v114 = vpop.xlane.xlu0 %113
    %v115 = vld [vmem:[%s1] sm:$0xff]
    %v116 = vld [vmem:[%s1 + $0x8] sm:$0xff]
    %v117 = vld [vmem:[%s1 + $0x10] sm:$0xff]
    %v118 = vld [vmem:[%s1 + $0x18] sm:$0xff]
    %v119 = vld [vmem:[%s1 + $0x20] sm:$0xff]
    %v120 = vld [vmem:[%s1 + $0x28] sm:$0xff]
    %v121 = vld [vmem:[%s1 + $0x30] sm:$0xff]
    %v122 = vld [vmem:[%s1 + $0x38] sm:$0xff]
    %v123 = vld [vmem:[%s2] sm:$0x1]
    %v125 = vlaneseq
    %v126 = vshrl.u32 %v125, 7
    %v127 = vsub.s32 0, %v126
    %v128 = vrot.slane %v123, %v127
    %v146 = vlaneseq
    %v147 = vand.u32 %v146, 127
    %v148 = vlaneseq
    %v149 = vshrl.u32 %v148, 7
    %v150 = vsub.s32 %v147, %v149
    %v151 = vrot.slane %v69, %v150
    %v152 = vadd.s32 %v147, 4294967288
    %v153 = vlaneseq
    %v154 = vshrl.u32 %v153, 7
    %v155 = vsub.s32 %v152, %v154
    %v156 = vrot.slane %v72, %v155
    %vm157 = vcmask 130112
    %v158 = vsel %vm157, %v156, %v151
    %v159 = vadd.s32 %v147, 4294967280
    %v160 = vlaneseq
    %v161 = vshrl.u32 %v160, 7
    %v162 = vsub.s32 %v159, %v161
    %v163 = vrot.slane %v75, %v162
    %vm164 = vcmask 195712
    %v165 = vsel %vm164, %v163, %v158
    %v166 = vadd.s32 %v147, 4294967272
    %v167 = vlaneseq
    %v168 = vshrl.u32 %v167, 7
    %v169 = vsub.s32 %v166, %v168
    %v170 = vrot.slane %v78, %v169
    %vm171 = vcmask 261312
    %v172 = vsel %vm171, %v170, %v165
    %v173 = vadd.s32 %v147, 4294967264
    %v174 = vlaneseq
    %v175 = vshrl.u32 %v174, 7
    %v176 = vsub.s32 %v173, %v175
    %v177 = vrot.slane %v81, %v176
    %vm178 = vcmask 326912
    %v179 = vsel %vm178, %v177, %v172
    %v180 = vadd.s32 %v147, 4294967256
    %v181 = vlaneseq
    %v182 = vshrl.u32 %v181, 7
    %v183 = vsub.s32 %v180, %v182
    %v184 = vrot.slane %v84, %v183
    %vm185 = vcmask 392512
    %v186 = vsel %vm185, %v184, %v179
    %v187 = vadd.s32 %v147, 4294967248
    %v188 = vlaneseq
    %v189 = vshrl.u32 %v188, 7
    %v190 = vsub.s32 %v187, %v189
    %v191 = vrot.slane %v87, %v190
    %vm192 = vcmask 458112
    %v193 = vsel %vm192, %v191, %v186
    %v194 = vadd.s32 %v147, 4294967240
    %v195 = vlaneseq
    %v196 = vshrl.u32 %v195, 7
    %v197 = vsub.s32 %v194, %v196
    %v198 = vrot.slane %v90, %v197
    %vm199 = vcmask 523712
    %v200 = vsel %vm199, %v198, %v193
    %v201 = vlaneseq
    %v202 = vshrl.u32 %v201, 7
    %v203 = vsub.s32 %v147, %v202
    %v204 = vrot.slane %v93, %v203
    %v205 = vlaneseq
    %v206 = vshrl.u32 %v205, 7
    %v207 = vsub.s32 %v152, %v206
    %v208 = vrot.slane %v96, %v207
    %v209 = vsel %vm157, %v208, %v204
    %v210 = vlaneseq
    %v211 = vshrl.u32 %v210, 7
    %v212 = vsub.s32 %v159, %v211
    %v213 = vrot.slane %v99, %v212
    %v214 = vsel %vm164, %v213, %v209
    %v215 = vlaneseq
    %v216 = vshrl.u32 %v215, 7
    %v217 = vsub.s32 %v166, %v216
    %v218 = vrot.slane %v102, %v217
    %v219 = vsel %vm171, %v218, %v214
    %v220 = vlaneseq
    %v221 = vshrl.u32 %v220, 7
    %v222 = vsub.s32 %v173, %v221
    %v223 = vrot.slane %v105, %v222
    %v224 = vsel %vm178, %v223, %v219
    %v225 = vlaneseq
    %v226 = vshrl.u32 %v225, 7
    %v227 = vsub.s32 %v180, %v226
    %v228 = vrot.slane %v108, %v227
    %v229 = vsel %vm185, %v228, %v224
    %v230 = vlaneseq
    %v231 = vshrl.u32 %v230, 7
    %v232 = vsub.s32 %v187, %v231
    %v233 = vrot.slane %v111, %v232
    %v234 = vsel %vm192, %v233, %v229
    %v235 = vlaneseq
    %v236 = vshrl.u32 %v235, 7
    %v237 = vsub.s32 %v194, %v236
    %v238 = vrot.slane %v114, %v237
    %v239 = vsel %vm199, %v238, %v234
    %vm240 = vcmask 1041409
    %v241 = vsel %vm240, %v239, %v200
    %vm242 = vcmask 523264
    %v243 = vsel %vm242, %v241, 0
    %245 = vmatprep.subr.mxu0 0.0
    %246 = vmatpush1.msra.mxu0 0.0
    %247 = vmatprep.subr.mxu0 0.0
    %248 = vmatpush1.msra.mxu0 0.0
    %249 = vmatprep.subr.mxu0 0.0
    %250 = vmatpush1.msra.mxu0 0.0
    %251 = vmatprep.subr.mxu0 0.0
    %252 = vmatpush1.msra.mxu0 0.0
    %253 = vmatprep.subr.mxu0 0.0
    %254 = vmatpush1.msra.mxu0 0.0
    %255 = vmatprep.subr.mxu0 0.0
    %256 = vmatpush1.msra.mxu0 0.0
    %257 = vmatprep.subr.mxu0 0.0
    %258 = vmatpush1.msra.mxu0 0.0
    %259 = vmatprep.subr.mxu0 0.0
    %260 = vmatpush1.msra.mxu0 0.0
    %261 = vmatprep.subr.mxu0 0.0
    %262 = vmatpush1.msra.mxu0 %v122
    %263 = vmatprep.subr.mxu0 0.0
    %264 = vmatpush1.msra.mxu0 %v121
    %265 = vmatprep.subr.mxu0 0.0
    %266 = vmatpush1.msra.mxu0 %v120
    %267 = vmatprep.subr.mxu0 0.0
    %268 = vmatpush1.msra.mxu0 %v119
    %269 = vmatprep.subr.mxu0 0.0
    %270 = vmatpush1.msra.mxu0 %v118
    %271 = vmatprep.subr.mxu0 0.0
    %272 = vmatpush1.msra.mxu0 %v117
    %273 = vmatprep.subr.mxu0 0.0
    %274 = vmatpush1.msra.mxu0 %v116
    %275 = vmatprep.subr.mxu0 0.0
    %276 = vmatpush1.msra.mxu0 %v115
    %277 = vmatprep.subr.mxu0 0.0
    %278 = vmatpush2.msra.mxu0 0.0
    %279 = vmatprep.subr.mxu0 0.0
    %280 = vmatpush2.msra.mxu0 0.0
    %281 = vmatprep.subr.mxu0 0.0
    %282 = vmatpush2.msra.mxu0 0.0
    %283 = vmatprep.subr.mxu0 0.0
    %284 = vmatpush2.msra.mxu0 0.0
    %285 = vmatprep.subr.mxu0 0.0
    %286 = vmatpush2.msra.mxu0 0.0
    %287 = vmatprep.subr.mxu0 0.0
    %288 = vmatpush2.msra.mxu0 0.0
    %289 = vmatprep.subr.mxu0 0.0
    %290 = vmatpush2.msra.mxu0 0.0
    %291 = vmatprep.subr.mxu0 0.0
    %292 = vmatpush2.msra.mxu0 0.0
    %293 = vmatprep.subr.mxu0 0.0
    %294 = vmatpush2.msra.mxu0 0.0
    %295 = vmatprep.subr.mxu0 0.0
    %296 = vmatpush2.msra.mxu0 0.0
    %297 = vmatprep.subr.mxu0 0.0
    %298 = vmatpush2.msra.mxu0 0.0
    %299 = vmatprep.subr.mxu0 0.0
    %300 = vmatpush2.msra.mxu0 0.0
    %301 = vmatprep.subr.mxu0 0.0
    %302 = vmatpush2.msra.mxu0 0.0
    %303 = vmatprep.subr.mxu0 0.0
    %304 = vmatpush2.msra.mxu0 0.0
    %305 = vmatprep.subr.mxu0 0.0
    %306 = vmatpush2.msra.mxu0 0.0
    %307 = vmatprep.subr.mxu0 0.0
    %308 = vmatpush2.msra.mxu0 0.0
    %309 = vmatprep.mubr.f32.mxu0 0.0
    %310 = vmatmul.mubr.f32.gmra.mxu0 %v243
    %v311 = vpop.f32.mrf.mxu0
    %v312 = vadd.f32 %v128, %v311
    %v313 = vpop.f32.mrf.mxu0
    %314 = vdwg.mxu0
    %v315 = vmax.f32 %v312, 0.0
    %v316 = vld [vmem:[%s3] sm:$0xf]
    %v317 = vld [vmem:[%s4] sm:$0x1]
    %v319 = vlaneseq
    %v320 = vshrl.u32 %v319, 7
    %v321 = vsub.s32 0, %v320
    %v322 = vrot.slane %v317, %v321
    %vm324 = vcmask 31744
    %v326 = vsel %vm324, %v315, 0
    %vm328 = vcmask 1043456
    %v330 = vsel %vm328, %v316, 0
    %332 = vmatprep.subr.mxu0 0.0
    %333 = vmatpush1.msra.mxu0 0.0
    %334 = vmatprep.subr.mxu0 0.0
    %335 = vmatpush1.msra.mxu0 0.0
    %336 = vmatprep.subr.mxu0 0.0
    %337 = vmatpush1.msra.mxu0 0.0
    %338 = vmatprep.subr.mxu0 0.0
    %339 = vmatpush1.msra.mxu0 0.0
    %340 = vmatprep.subr.mxu0 0.0
    %341 = vmatpush1.msra.mxu0 0.0
    %342 = vmatprep.subr.mxu0 0.0
    %343 = vmatpush1.msra.mxu0 0.0
    %344 = vmatprep.subr.mxu0 0.0
    %345 = vmatpush1.msra.mxu0 0.0
    %346 = vmatprep.subr.mxu0 0.0
    %347 = vmatpush1.msra.mxu0 0.0
    %348 = vmatprep.subr.mxu0 0.0
    %349 = vmatpush1.msra.mxu0 0.0
    %350 = vmatprep.subr.mxu0 0.0
    %351 = vmatpush1.msra.mxu0 0.0
    %352 = vmatprep.subr.mxu0 0.0
    %353 = vmatpush1.msra.mxu0 0.0
    %354 = vmatprep.subr.mxu0 0.0
    %355 = vmatpush1.msra.mxu0 0.0
    %356 = vmatprep.subr.mxu0 0.0
    %357 = vmatpush1.msra.mxu0 0.0
    %358 = vmatprep.subr.mxu0 0.0
    %359 = vmatpush1.msra.mxu0 0.0
    %360 = vmatprep.subr.mxu0 0.0
    %361 = vmatpush1.msra.mxu0 0.0
    %362 = vmatprep.subr.mxu0 0.0
    %363 = vmatpush1.msra.mxu0 %v330
    %364 = vmatprep.subr.mxu0 0.0
    %365 = vmatpush2.msra.mxu0 0.0
    %366 = vmatprep.subr.mxu0 0.0
    %367 = vmatpush2.msra.mxu0 0.0
    %368 = vmatprep.subr.mxu0 0.0
    %369 = vmatpush2.msra.mxu0 0.0
    %370 = vmatprep.subr.mxu0 0.0
    %371 = vmatpush2.msra.mxu0 0.0
    %372 = vmatprep.subr.mxu0 0.0
    %373 = vmatpush2.msra.mxu0 0.0
    %374 = vmatprep.subr.mxu0 0.0
    %375 = vmatpush2.msra.mxu0 0.0
    %376 = vmatprep.subr.mxu0 0.0
    %377 = vmatpush2.msra.mxu0 0.0
    %378 = vmatprep.subr.mxu0 0.0
    %379 = vmatpush2.msra.mxu0 0.0
    %380 = vmatprep.subr.mxu0 0.0
    %381 = vmatpush2.msra.mxu0 0.0
    %382 = vmatprep.subr.mxu0 0.0
    %383 = vmatpush2.msra.mxu0 0.0
    %384 = vmatprep.subr.mxu0 0.0
    %385 = vmatpush2.msra.mxu0 0.0
    %386 = vmatprep.subr.mxu0 0.0
    %387 = vmatpush2.msra.mxu0 0.0
    %388 = vmatprep.subr.mxu0 0.0
    %389 = vmatpush2.msra.mxu0 0.0
    %390 = vmatprep.subr.mxu0 0.0
    %391 = vmatpush2.msra.mxu0 0.0
    %392 = vmatprep.subr.mxu0 0.0
    %393 = vmatpush2.msra.mxu0 0.0
    %394 = vmatprep.subr.mxu0 0.0
    %395 = vmatpush2.msra.mxu0 0.0
    %396 = vmatprep.mubr.f32.mxu0 0.0
    %397 = vmatmul.mubr.f32.gmra.mxu0 %v326
    %v398 = vpop.f32.mrf.mxu0
    %v399 = vadd.f32 %v322, %v398
    %v400 = vpop.f32.mrf.mxu0
    %401 = vdwg.mxu0
    %v402 = vxor.u32 %v399, 2147483648
    %v403 = vmul.f32 %v402, 1.442695
    %v404 = vpow.pop %v403
    %v405 = vadd.f32 %v404, 1.0
    %v406 = vrcp.pop %v405
    %v407 = vmul.f32 1.0, %v406
    %v408 = vlaneseq
    %v409 = vshrl.u32 %v408, 7
    %v410 = vsub.s32 0, %v409
    %v411 = vrot.slane %v407, %v410
    %413 = vbcast.lane.b32.xlu0 %v411, 256
    %v414 = vpop.permute.xlu0 %413
    %s416 = sor.u32 256, 8
    %417 = vbcast.lane.b32.xlu0 %v411, %s416
    %v418 = vpop.permute.xlu0 %417
    %s420 = sor.u32 256, 16
    %421 = vbcast.lane.b32.xlu0 %v411, %s420
    %v422 = vpop.permute.xlu0 %421
    %s424 = sor.u32 256, 24
    %425 = vbcast.lane.b32.xlu0 %v411, %s424
    %v426 = vpop.permute.xlu0 %425
    %s428 = sor.u32 256, 32
    %429 = vbcast.lane.b32.xlu0 %v411, %s428
    %v430 = vpop.permute.xlu0 %429
    %s432 = sor.u32 256, 40
    %433 = vbcast.lane.b32.xlu0 %v411, %s432
    %v434 = vpop.permute.xlu0 %433
    %s436 = sor.u32 256, 48
    %437 = vbcast.lane.b32.xlu0 %v411, %s436
    %v438 = vpop.permute.xlu0 %437
    %s440 = sor.u32 256, 56
    %441 = vbcast.lane.b32.xlu0 %v411, %s440
    %v442 = vpop.permute.xlu0 %441
    %v443 = vlaneseq
    %v444 = vshrl.u32 %v443, 7
    %v445 = vsub.s32 1, %v444
    %v446 = vrot.slane %v407, %v445
    %448 = vbcast.lane.b32.xlu0 %v446, 256
    %v449 = vpop.permute.xlu0 %448
    %s451 = sor.u32 256, 8
    %452 = vbcast.lane.b32.xlu0 %v446, %s451
    %v453 = vpop.permute.xlu0 %452
    %s455 = sor.u32 256, 16
    %456 = vbcast.lane.b32.xlu0 %v446, %s455
    %v457 = vpop.permute.xlu0 %456
    %s459 = sor.u32 256, 24
    %460 = vbcast.lane.b32.xlu0 %v446, %s459
    %v461 = vpop.permute.xlu0 %460
    %s463 = sor.u32 256, 32
    %464 = vbcast.lane.b32.xlu0 %v446, %s463
    %v465 = vpop.permute.xlu0 %464
    %s467 = sor.u32 256, 40
    %468 = vbcast.lane.b32.xlu0 %v446, %s467
    %v469 = vpop.permute.xlu0 %468
    %s471 = sor.u32 256, 48
    %472 = vbcast.lane.b32.xlu0 %v446, %s471
    %v473 = vpop.permute.xlu0 %472
    %s475 = sor.u32 256, 56
    %476 = vbcast.lane.b32.xlu0 %v446, %s475
    %v477 = vpop.permute.xlu0 %476
    %v478 = vmul.f32 %v35, %v414
    %v479 = vmul.f32 %v36, %v414
    %v480 = vmul.f32 %v37, %v418
    %v481 = vmul.f32 %v38, %v418
    %v482 = vmul.f32 %v39, %v422
    %v483 = vmul.f32 %v40, %v422
    %v484 = vmul.f32 %v41, %v426
    %v485 = vmul.f32 %v42, %v426
    %v486 = vmul.f32 %v43, %v430
    %v487 = vmul.f32 %v44, %v430
    %v488 = vmul.f32 %v45, %v434
    %v489 = vmul.f32 %v46, %v434
    %v490 = vmul.f32 %v47, %v438
    %v491 = vmul.f32 %v48, %v438
    %v492 = vmul.f32 %v49, %v442
    %v493 = vmul.f32 %v50, %v442
    %v494 = vmul.f32 %v51, %v449
    %v495 = vmul.f32 %v52, %v449
    %v496 = vmul.f32 %v53, %v453
    %v497 = vmul.f32 %v54, %v453
    %v498 = vmul.f32 %v55, %v457
    %v499 = vmul.f32 %v56, %v457
    %v500 = vmul.f32 %v57, %v461
    %v501 = vmul.f32 %v58, %v461
    %v502 = vmul.f32 %v59, %v465
    %v503 = vmul.f32 %v60, %v465
    %v504 = vmul.f32 %v61, %v469
    %v505 = vmul.f32 %v62, %v469
    %v506 = vmul.f32 %v63, %v473
    %v507 = vmul.f32 %v64, %v473
    %v508 = vmul.f32 %v65, %v477
    %v509 = vmul.f32 %v66, %v477
    %510 = vst [vmem:[#allocation5] sm:$0xff] %v478
    %511 = vst [vmem:[#allocation5 + $0x8] sm:$0xff] %v479
    %512 = vst [vmem:[#allocation5 + $0x10] sm:$0xff] %v480
    %513 = vst [vmem:[#allocation5 + $0x18] sm:$0xff] %v481
    %514 = vst [vmem:[#allocation5 + $0x20] sm:$0xff] %v482
    %515 = vst [vmem:[#allocation5 + $0x28] sm:$0xff] %v483
    %516 = vst [vmem:[#allocation5 + $0x30] sm:$0xff] %v484
    %517 = vst [vmem:[#allocation5 + $0x38] sm:$0xff] %v485
    %518 = vst [vmem:[#allocation5 + $0x40] sm:$0xff] %v486
    %519 = vst [vmem:[#allocation5 + $0x48] sm:$0xff] %v487
    %520 = vst [vmem:[#allocation5 + $0x50] sm:$0xff] %v488
    %521 = vst [vmem:[#allocation5 + $0x58] sm:$0xff] %v489
    %522 = vst [vmem:[#allocation5 + $0x60] sm:$0xff] %v490
    %523 = vst [vmem:[#allocation5 + $0x68] sm:$0xff] %v491
    %524 = vst [vmem:[#allocation5 + $0x70] sm:$0xff] %v492
    %525 = vst [vmem:[#allocation5 + $0x78] sm:$0xff] %v493
    %526 = vst [vmem:[#allocation5 + $0x80] sm:$0xff] %v494
    %527 = vst [vmem:[#allocation5 + $0x88] sm:$0xff] %v495
    %528 = vst [vmem:[#allocation5 + $0x90] sm:$0xff] %v496
    %529 = vst [vmem:[#allocation5 + $0x98] sm:$0xff] %v497
    %530 = vst [vmem:[#allocation5 + $0xa0] sm:$0xff] %v498
    %531 = vst [vmem:[#allocation5 + $0xa8] sm:$0xff] %v499
    %532 = vst [vmem:[#allocation5 + $0xb0] sm:$0xff] %v500
    %533 = vst [vmem:[#allocation5 + $0xb8] sm:$0xff] %v501
    %534 = vst [vmem:[#allocation5 + $0xc0] sm:$0xff] %v502
    %535 = vst [vmem:[#allocation5 + $0xc8] sm:$0xff] %v503
    %536 = vst [vmem:[#allocation5 + $0xd0] sm:$0xff] %v504
    %537 = vst [vmem:[#allocation5 + $0xd8] sm:$0xff] %v505
    %538 = vst [vmem:[#allocation5 + $0xe0] sm:$0xff] %v506
    %539 = vst [vmem:[#allocation5 + $0xe8] sm:$0xff] %v507
    %540 = vst [vmem:[#allocation5 + $0xf0] sm:$0xff] %v508
    %541 = vst [vmem:[#allocation5 + $0xf8] sm:$0xff] %v509
    // Predicated region
    $region26: #{tpu_custom_call.1} parent=1 // pred_check
      _
    $region27: #{tpu_custom_call.1} parent=1 // pred_check_branch
      %543 = sbr.rel (0) target = $region29
    $region28: #{tpu_custom_call.1} parent=1 // pred_region
      %s545 = ssub.s32 4096, 4096
      %546 = vsyncadd [#allocation4], %s545
      %s547 = sshll.u32 [#allocation5], 4
      %s548 = int_to_ptr.vmem [resolvable:$true] %s547
      %553 = dma.vmem_to_hbm [thread:$0]  %s548, 4096, %s5, [#allocation4], 256, 256, 16
    $region29: #{tpu_custom_call.1} parent=1 // pred_fallthru
      _
    // Predicated region
    $region30: #{tpu_custom_call.1} parent=1 // pred_check
      _
    $region31: #{tpu_custom_call.1} parent=1 // pred_check_branch
      %555 = sbr.rel (0) target = $region33
    $region32: #{tpu_custom_call.1} parent=1 // pred_region
      %556 = dma.done [#allocation4], 4096
    $region33: #{tpu_custom_call.1} parent=1 // pred_fallthru
      _
    %557 = vsyncpa [#allocation3], 1
    %558 = vsyncpa [#allocation4], 1

</llo_original>
